<compile_context>
chip_gen: v5e
topology: v5e:2x2
jax: 0.10.0
libtpu: 0.0.40
codegen_flags: <defaults>
</compile_context>

<pallas_src>
import jax
import jax.numpy as jnp
from jax.experimental import pallas as pl
from jax.experimental.pallas import tpu as pltpu


def _round_up(x: int, m: int) -> int:
    return ((x + m - 1) // m) * m


def _linear_kernel_single_k(x_ref, wt_ref, b_ref, o_ref):
    # x_ref: (tm, K)  wt_ref: (K, tn)  b_ref: (1, tn) f32  o_ref: (tm, tn)
    acc = jnp.dot(x_ref[...], wt_ref[...], preferred_element_type=jnp.float32)
    o_ref[...] = (acc + b_ref[...]).astype(o_ref.dtype)


def _linear_kernel_multi_k(x_ref, wt_ref, b_ref, o_ref, acc_ref):
    # x_ref: (tm, tk)   wt_ref: (tk, tn)   b_ref: (1, tn) f32
    # o_ref: (tm, tn)   acc_ref: (tm, tn) f32 scratch, lives across the K axis.
    k = pl.program_id(2)

    @pl.when(k == 0)
    def _():
        acc_ref[...] = jnp.zeros_like(acc_ref)

    acc_ref[...] += jnp.dot(
        x_ref[...], wt_ref[...], preferred_element_type=jnp.float32
    )

    @pl.when(k == pl.num_programs(2) - 1)
    def _():
        o_ref[...] = (acc_ref[...] + b_ref[...]).astype(o_ref.dtype)


def quant_layer_linear(x, wt, bias_f32, *, tm=256, tn=256, tk=1024):
    """Pallas equivalent of QuantLayer.forward (Linear org_module, quant disabled).

    x:        (..., in_features)
    wt:       (in_features, out_features)   -- pre-transposed weight
    bias_f32: (out_features,) float32
    """
    K, N = wt.shape
    assert x.shape[-1] == K
    lead_shape = x.shape[:-1]
    M = 1
    for d in lead_shape:
        M *= d
    x2d = x.reshape(M, K)

    # Sublane multiple for second-to-last block dims (8 for 4-byte, 16 for 2-byte).
    sub = 16 if x2d.dtype.itemsize == 2 else 8

    # Clamp MXU-sized tiles to the (rounded-up) problem size.
    tm = min(tm, _round_up(M, sub))
    tn = min(tn, _round_up(N, 128))
    tk = min(tk, _round_up(K, 128))

    Mp, Kp, Np = _round_up(M, tm), _round_up(K, tk), _round_up(N, tn)

    # Pad ragged shapes; zero K-padding is exact (adds 0 to the accumulation).
    if (Mp, Kp) != (M, K):
        x2d = jnp.pad(x2d, ((0, Mp - M), (0, Kp - K)))
    wtp = wt
    if (Kp, Np) != (K, N):
        wtp = jnp.pad(wt, ((0, Kp - K), (0, Np - N)))
    b2d = bias_f32.reshape(1, N)
    if Np != N:
        b2d = jnp.pad(b2d, ((0, 0), (0, Np - N)))

    kt = Kp // tk
    cost = pl.CostEstimate(
        flops=2 * M * K * N,
        transcendentals=0,
        bytes_accessed=(
            x2d.size * x2d.dtype.itemsize
            + wtp.size * wtp.dtype.itemsize
            + b2d.size * 4
            + M * N * x.dtype.itemsize
        ),
    )

    if kt == 1:
        # Fast path: whole K fits in one tile -> no accumulator, 2-D grid.
        out2d = pl.pallas_call(
            _linear_kernel_single_k,
            out_shape=jax.ShapeDtypeStruct((Mp, Np), x.dtype),
            grid_spec=pltpu.PrefetchScalarGridSpec(
                num_scalar_prefetch=0,
                grid=(Mp // tm, Np // tn),
                in_specs=[
                    pl.BlockSpec((tm, Kp), lambda i, j: (i, 0)),
                    pl.BlockSpec((Kp, tn), lambda i, j: (0, j)),
                    pl.BlockSpec((1, tn), lambda i, j: (0, j)),
                ],
                out_specs=pl.BlockSpec((tm, tn), lambda i, j: (i, j)),
            ),
            compiler_params=pltpu.CompilerParams(
                dimension_semantics=("parallel", "parallel"),
            ),
            cost_estimate=cost,
        )(x2d, wtp, b2d)
    else:
        out2d = pl.pallas_call(
            _linear_kernel_multi_k,
            out_shape=jax.ShapeDtypeStruct((Mp, Np), x.dtype),
            grid_spec=pltpu.PrefetchScalarGridSpec(
                num_scalar_prefetch=0,
                grid=(Mp // tm, Np // tn, kt),
                in_specs=[
                    pl.BlockSpec((tm, tk), lambda i, j, k: (i, k)),
                    pl.BlockSpec((tk, tn), lambda i, j, k: (k, j)),
                    pl.BlockSpec((1, tn), lambda i, j, k: (0, j)),
                ],
                out_specs=pl.BlockSpec((tm, tn), lambda i, j, k: (i, j)),
                scratch_shapes=[pltpu.VMEM((tm, tn), jnp.float32)],
            ),
            compiler_params=pltpu.CompilerParams(
                dimension_semantics=("parallel", "parallel", "arbitrary"),
            ),
            cost_estimate=cost,
        )(x2d, wtp, b2d)

    if (Mp, Np) != (M, N):
        out2d = out2d[:M, :N]
    return out2d.reshape(*lead_shape, N)


class QuantLayerPallas:
    """Minimal mirror of QuantLayer state (Linear org_module, quant disabled)."""

    def __init__(self, weight, bias=None):
        weight = jnp.asarray(weight)      # (out_features, in_features)
        self.weight = weight
        self.org_weight = weight
        self.bias = bias
        self.org_bias = bias
        self.out_features, self.in_features = weight.shape
        # Pre-transpose once at construction; avoids a per-call HBM round trip.
        self._wt_cache = {weight.dtype: weight.T}
        b = bias if bias is not None else jnp.zeros((self.out_features,), weight.dtype)
        self._bias_f32 = jnp.asarray(b, jnp.float32)
        self.weight_quant = False
        self.act_quant = False
        self.disable_act_quant = False
        self.split = 0
        self.smooth_quant = False

    def set_quant_state(self, weight_quant=False, act_quant=False):
        # TODO(synk): quantized branches need WeightQuantizer/ActQuantizer defs.
        self.weight_quant = weight_quant
        self.act_quant = act_quant

    def get_quant_state(self):
        return (self.weight_quant, self.act_quant)

    def _get_wt(self, x_dtype):
        wt = self._wt_cache[self.org_weight.dtype]
        # Mirror the torch rule: fp32 weight + fp16 input -> downcast weight.
        # (bf16 would be the faster MXU path on TPU; accumulation stays f32
        #  inside the kernel either way.)
        if self.org_weight.dtype == jnp.float32 and x_dtype == jnp.float16:
            if x_dtype not in self._wt_cache:
                self._wt_cache[x_dtype] = wt.astype(x_dtype)
            wt = self._wt_cache[x_dtype]
        return wt

    def __call__(self, x, scale=1.0, split=0, smooth_quant_enable=False):
        # Default-state forward: F.linear + StraightThrough (identity).
        wt = self._get_wt(x.dtype)
        return quant_layer_linear(x, wt, self._bias_f32)


if __name__ == "__main__":
    key = jax.random.PRNGKey(0)
    k_x, k_w, k_b, k_x2, k_w2, k_b2, k_x3, k_w3, k_b3 = jax.random.split(key, 9)

    # --- Test 1: tile-divisible shapes, single-K fast path ---
    batch, seq, in_features, out_features = 2, 8, 128, 256
    x = jax.random.normal(k_x, (batch, seq, in_features), dtype=jnp.float32)
    weight = jax.random.normal(k_w, (out_features, in_features), dtype=jnp.float32) * 0.02
    bias = jax.random.normal(k_b, (out_features,), dtype=jnp.float32) * 0.01

    layer = QuantLayerPallas(weight, bias)
    out = jax.block_until_ready(layer(x))
    ref = jnp.einsum("bsk,nk->bsn", x, weight) + bias
    assert out.shape == (batch, seq, out_features)
    assert jnp.allclose(out, ref, atol=1e-4, rtol=1e-4)

    # --- Test 2: ragged shapes (exercise the pad/slice path) ---
    b2, s2, k2, n2 = 3, 5, 96, 200
    x2 = jax.random.normal(k_x2, (b2, s2, k2), dtype=jnp.float32)
    w2 = jax.random.normal(k_w2, (n2, k2), dtype=jnp.float32) * 0.02
    bb2 = jax.random.normal(k_b2, (n2,), dtype=jnp.float32) * 0.01

    layer2 = QuantLayerPallas(w2, bb2)
    out2 = jax.block_until_ready(layer2(x2))
    ref2 = jnp.einsum("bsk,nk->bsn", x2, w2) + bb2
    assert out2.shape == (b2, s2, n2)
    assert jnp.allclose(out2, ref2, atol=1e-4, rtol=1e-4)

    # --- Test 3: multi-K accumulation path (force small tk) ---
    b3, s3, k3, n3 = 2, 8, 384, 256
    x3 = jax.random.normal(k_x3, (b3, s3, k3), dtype=jnp.float32)
    w3 = jax.random.normal(k_w3, (n3, k3), dtype=jnp.float32) * 0.02
    bb3 = jax.random.normal(k_b3, (n3,), dtype=jnp.float32) * 0.01
    out3 = jax.block_until_ready(
        quant_layer_linear(x3, w3.T, bb3.astype(jnp.float32), tk=128)
    )
    ref3 = jnp.einsum("bsk,nk->bsn", x3, w3) + bb3
    assert out3.shape == (b3, s3, n3)
    assert jnp.allclose(out3, ref3, atol=1e-4, rtol=1e-4)

    print("KERNEL_OK")
</pallas_src>

<mosaic_0001>
module attributes {stable_mosaic.version = 11 : i64} {
  func.func @_linear_kernel_single_k(%arg0: i32, %arg1: i32, %arg2: memref<16x128xf32, #tpu.memory_space<vmem>>, %arg3: memref<128x256xf32, #tpu.memory_space<vmem>>, %arg4: memref<1x256xf32, #tpu.memory_space<vmem>>, %arg5: memref<16x256xf32, #tpu.memory_space<vmem>>) attributes {dimension_semantics = [#tpu.dimension_semantics<parallel>, #tpu.dimension_semantics<parallel>], iteration_bounds = array<i64: 1, 1>, scalar_prefetch = 0 : i64, scratch_operands = 0 : i64, tpu.core_type = #tpu.core_type<tc>, window_params = [{transform_indices = @transform_0, window_bounds = array<i64: 16, 128>}, {transform_indices = @transform_1, window_bounds = array<i64: 128, 256>}, {transform_indices = @transform_2, window_bounds = array<i64: 1, 256>}, {transform_indices = @transform_3, window_bounds = array<i64: 16, 256>}]} {
    %c0 = arith.constant 0 : index
    %c0_0 = arith.constant 0 : index
    %0 = vector.load %arg2[%c0, %c0_0] : memref<16x128xf32, #tpu.memory_space<vmem>>, vector<16x128xf32>
    %c0_1 = arith.constant 0 : index
    %c0_2 = arith.constant 0 : index
    %1 = vector.load %arg3[%c0_1, %c0_2] : memref<128x256xf32, #tpu.memory_space<vmem>>, vector<128x256xf32>
    %cst = arith.constant dense<0.000000e+00> : vector<16x256xf32>
    %2 = tpu.matmul %0, %1, %cst {dimension_numbers = #tpu.dot_dimension_numbers<[1], [0], [0], [1], [0, 0, 1, 1], [], []>} : vector<16x128xf32>, vector<128x256xf32>, vector<16x256xf32> -> vector<16x256xf32>
    %c0_3 = arith.constant 0 : index
    %c0_4 = arith.constant 0 : index
    %3 = vector.load %arg4[%c0_3, %c0_4] : memref<1x256xf32, #tpu.memory_space<vmem>>, vector<1x256xf32>
    %4 = vector.broadcast %3 : vector<1x256xf32> to vector<16x256xf32>
    %5 = arith.addf %2, %4 : vector<16x256xf32>
    %c0_5 = arith.constant 0 : index
    %c0_6 = arith.constant 0 : index
    %6 = vector.load %arg5[%c0_5, %c0_6] : memref<16x256xf32, #tpu.memory_space<vmem>>, vector<16x256xf32>
    tpu.vector_store %arg5[%c0_5, %c0_6], %5 {strides = array<i32>} : memref<16x256xf32, #tpu.memory_space<vmem>>, vector<16x256xf32>,
    return
  }
  func.func @transform_0(%arg0: i32, %arg1: i32) -> (i32, i32) {
    %c0_i32 = arith.constant 0 : i32
    %c0_i32_0 = arith.constant 0 : i32
    return %arg0, %c0_i32 : i32, i32
  }
  func.func @transform_1(%arg0: i32, %arg1: i32) -> (i32, i32) {
    %c0_i32 = arith.constant 0 : i32
    %c0_i32_0 = arith.constant 0 : i32
    return %c0_i32, %arg1 : i32, i32
  }
  func.func @transform_2(%arg0: i32, %arg1: i32) -> (i32, i32) {
    %c0_i32 = arith.constant 0 : i32
    %c0_i32_0 = arith.constant 0 : i32
    return %c0_i32, %arg1 : i32, i32
  }
  func.func @transform_3(%arg0: i32, %arg1: i32) -> (i32, i32) {
    %c0_i32 = arith.constant 0 : i32
    return %arg0, %arg1 : i32, i32
  }
}

</mosaic_0001>

<llo_original>
// kernel: tpu_custom_call.1
$region0: #{tpu_custom_call.1}
  #allocation0 [shape = 'u32[]', space=smem, size = 0x4, offset = 0x4, fixed_abs, tag = 'smem constant byte address 0x4 - core index']
  #allocation1 [shape = 'u32[72,128]{1,0:T(1,128)}', space=vmem, size = 0x9000, scoped, tag = 'internal scratch']
  %s0 = inlined_call_operand.hbm [shape: f32[16,128], index: 0, kind: input, shape index: {}]
  %s1 = inlined_call_operand.hbm [shape: f32[128,256], index: 1, kind: input, shape index: {}]
  %s2 = inlined_call_operand.hbm [shape: f32[1,256], index: 2, kind: input, shape index: {}]
  %s3 = inlined_call_operand.hbm [shape: f32[16,256], index: 3, kind: output, shape index: {}]
  %s4 = sld [smem:[#allocation0]]
  $region34: #{tpu_custom_call.1} parent=0
    _
  %s6 = ssub.s32 1, %s4
  %s7 = scalar_select 0, %s6, %s4
  $region1: #{tpu_custom_call.1} parent=0
    #allocation2 [shape = 'u8[8192]{0}', space=vmem, size = 0x2000, scoped, tag = 'input window, operand 0, single buffered']
    #allocation3 [shape = 's32[1]{0}', space=sflag, size = 0x4, scoped, tag = 'scoped memory for tpu_custom_call.1']
    #allocation4 [shape = 's32[1]{0}', space=sflag, size = 0x4, scoped, tag = 'scoped memory for tpu_custom_call.1']
    #allocation5 [shape = 'u8[131072]{0}', space=vmem, size = 0x20000, scoped, tag = 'input window, operand 1, single buffered']
    #allocation6 [shape = 's32[1]{0}', space=sflag, size = 0x4, scoped, tag = 'scoped memory for tpu_custom_call.1']
    #allocation7 [shape = 'u8[1024]{0}', space=vmem, size = 0x400, scoped, tag = 'input window, operand 2, single buffered']
    #allocation8 [shape = 'u8[16384]{0}', space=vmem, size = 0x4000, scoped, tag = 'output window, operand 0, single buffered']
    %8 = vsyncpa [#allocation3], 0
    %9 = vsyncpa [#allocation6], 0
    %10 = vsyncpa [#allocation4], 0
    // Predicated region
    $region2: #{tpu_custom_call.1} parent=1 // pred_check
      _
    $region3: #{tpu_custom_call.1} parent=1 // pred_check_branch
      %12 = sbr.rel (0) target = $region5
    $region4: #{tpu_custom_call.1} parent=1 // pred_region
      %14 = vsyncadd [#allocation3], 0
      %s15 = sshll.u32 %s0, 4
      %s16 = int_to_ptr.hbm [resolvable:$true] %s15
      %s17 = sshll.u32 [#allocation2], 4
      %s18 = int_to_ptr.vmem [resolvable:$true] %s17
      %23 = dma.hbm_to_vmem [thread:$0]  %s16, 256, %s18, [#allocation3], 128, 128, 8
    $region5: #{tpu_custom_call.1} parent=1 // pred_fallthru
      _
    // Predicated region
    $region6: #{tpu_custom_call.1} parent=1 // pred_check
      _
    $region7: #{tpu_custom_call.1} parent=1 // pred_check_branch
      %25 = sbr.rel (0) target = $region9
    $region8: #{tpu_custom_call.1} parent=1 // pred_region
      %27 = vsyncadd [#allocation6], 0
      %s28 = sshll.u32 %s1, 4
      %s29 = int_to_ptr.hbm [resolvable:$true] %s28
      %s30 = sshll.u32 [#allocation5], 4
      %s31 = int_to_ptr.vmem [resolvable:$true] %s30
      %36 = dma.hbm_to_vmem [thread:$0]  %s29, 4096, %s31, [#allocation6], 256, 256, 16
    $region9: #{tpu_custom_call.1} parent=1 // pred_fallthru
      _
    // Predicated region
    $region10: #{tpu_custom_call.1} parent=1 // pred_check
      _
    $region11: #{tpu_custom_call.1} parent=1 // pred_check_branch
      %38 = sbr.rel (0) target = $region13
    $region12: #{tpu_custom_call.1} parent=1 // pred_region
      %40 = vsyncadd [#allocation6], 0
      %s42 = sshll.u32 %s2, 4
      %s43 = int_to_ptr.hbm [resolvable:$true] %s42
      %s44 = sshll.u32 [#allocation7], 4
      %s45 = int_to_ptr.vmem [resolvable:$true] %s44
      %47 = dma.hbm_to_vmem [thread:$0]  %s43, 32, %s45, [#allocation6]
    $region13: #{tpu_custom_call.1} parent=1 // pred_fallthru
      _
    // Predicated region
    $region14: #{tpu_custom_call.1} parent=1 // pred_check
      _
    $region15: #{tpu_custom_call.1} parent=1 // pred_check_branch
      %49 = sbr.rel (0) target = $region17
    $region16: #{tpu_custom_call.1} parent=1 // pred_region
      %51 = dma.done [#allocation3], 256
    $region17: #{tpu_custom_call.1} parent=1 // pred_fallthru
      _
    // Predicated region
    $region18: #{tpu_custom_call.1} parent=1 // pred_check
      _
    $region19: #{tpu_custom_call.1} parent=1 // pred_check_branch
      %53 = sbr.rel (0) target = $region21
    $region20: #{tpu_custom_call.1} parent=1 // pred_region
      %55 = dma.done [#allocation6], 4096
    $region21: #{tpu_custom_call.1} parent=1 // pred_fallthru
      _
    // Predicated region
    $region22: #{tpu_custom_call.1} parent=1 // pred_check
      _
    $region23: #{tpu_custom_call.1} parent=1 // pred_check_branch
      %57 = sbr.rel (0) target = $region25
    $region24: #{tpu_custom_call.1} parent=1 // pred_region
      %59 = dma.done [#allocation6], 32
    $region25: #{tpu_custom_call.1} parent=1 // pred_fallthru
      _
    %v60 = vld [vmem:[#allocation2] sm:$0xff]
    %v61 = vld [vmem:[#allocation2 + $0x8] sm:$0xff]
    %v62 = vld [vmem:[#allocation5] sm:$0xff]
    %v63 = vld [vmem:[#allocation5 + $0x8] sm:$0xff]
    %v64 = vld [vmem:[#allocation5 + $0x10] sm:$0xff]
    %v65 = vld [vmem:[#allocation5 + $0x18] sm:$0xff]
    %v66 = vld [vmem:[#allocation5 + $0x20] sm:$0xff]
    %v67 = vld [vmem:[#allocation5 + $0x28] sm:$0xff]
    %v68 = vld [vmem:[#allocation5 + $0x30] sm:$0xff]
    %v69 = vld [vmem:[#allocation5 + $0x38] sm:$0xff]
    %v70 = vld [vmem:[#allocation5 + $0x40] sm:$0xff]
    %v71 = vld [vmem:[#allocation5 + $0x48] sm:$0xff]
    %v72 = vld [vmem:[#allocation5 + $0x50] sm:$0xff]
    %v73 = vld [vmem:[#allocation5 + $0x58] sm:$0xff]
    %v74 = vld [vmem:[#allocation5 + $0x60] sm:$0xff]
    %v75 = vld [vmem:[#allocation5 + $0x68] sm:$0xff]
    %v76 = vld [vmem:[#allocation5 + $0x70] sm:$0xff]
    %v77 = vld [vmem:[#allocation5 + $0x78] sm:$0xff]
    %v78 = vld [vmem:[#allocation5 + $0x80] sm:$0xff]
    %v79 = vld [vmem:[#allocation5 + $0x88] sm:$0xff]
    %v80 = vld [vmem:[#allocation5 + $0x90] sm:$0xff]
    %v81 = vld [vmem:[#allocation5 + $0x98] sm:$0xff]
    %v82 = vld [vmem:[#allocation5 + $0xa0] sm:$0xff]
    %v83 = vld [vmem:[#allocation5 + $0xa8] sm:$0xff]
    %v84 = vld [vmem:[#allocation5 + $0xb0] sm:$0xff]
    %v85 = vld [vmem:[#allocation5 + $0xb8] sm:$0xff]
    %v86 = vld [vmem:[#allocation5 + $0xc0] sm:$0xff]
    %v87 = vld [vmem:[#allocation5 + $0xc8] sm:$0xff]
    %v88 = vld [vmem:[#allocation5 + $0xd0] sm:$0xff]
    %v89 = vld [vmem:[#allocation5 + $0xd8] sm:$0xff]
    %v90 = vld [vmem:[#allocation5 + $0xe0] sm:$0xff]
    %v91 = vld [vmem:[#allocation5 + $0xe8] sm:$0xff]
    %v92 = vld [vmem:[#allocation5 + $0xf0] sm:$0xff]
    %v93 = vld [vmem:[#allocation5 + $0xf8] sm:$0xff]
    %v94 = vld [vmem:[#allocation7] sm:$0x3]
    %v96 = vperm.slane %v94, 0
    %v97 = vperm.slane %v94, 1
    %100 = vmatpush.msra.mxu0 %v92
    %101 = vmatpush.msra.mxu0 %v90
    %102 = vmatpush.msra.mxu0 %v88
    %103 = vmatpush.msra.mxu0 %v86
    %104 = vmatpush.msra.mxu0 %v84
    %105 = vmatpush.msra.mxu0 %v82
    %106 = vmatpush.msra.mxu0 %v80
    %107 = vmatpush.msra.mxu0 %v78
    %108 = vmatpush.msra.mxu0 %v76
    %109 = vmatpush.msra.mxu0 %v74
    %110 = vmatpush.msra.mxu0 %v72
    %111 = vmatpush.msra.mxu0 %v70
    %112 = vmatpush.msra.mxu0 %v68
    %113 = vmatpush.msra.mxu0 %v66
    %114 = vmatpush.msra.mxu0 %v64
    %115 = vmatpush.msra.mxu0 %v62
    %116 = vmatmul.f32.gmra.mxu0 %v60
    %v117 = vpop.f32.mrf.mxu0
    %v118 = vadd.f32 %v96, %v117
    %119 = vmatmul.f32.gmra.mxu0 %v61
    %v120 = vpop.f32.mrf.mxu0
    %v121 = vadd.f32 %v96, %v120
    %122 = vdwg.mxu0
    %123 = vmatpush.msra.mxu0 %v93
    %124 = vmatpush.msra.mxu0 %v91
    %125 = vmatpush.msra.mxu0 %v89
    %126 = vmatpush.msra.mxu0 %v87
    %127 = vmatpush.msra.mxu0 %v85
    %128 = vmatpush.msra.mxu0 %v83
    %129 = vmatpush.msra.mxu0 %v81
    %130 = vmatpush.msra.mxu0 %v79
    %131 = vmatpush.msra.mxu0 %v77
    %132 = vmatpush.msra.mxu0 %v75
    %133 = vmatpush.msra.mxu0 %v73
    %134 = vmatpush.msra.mxu0 %v71
    %135 = vmatpush.msra.mxu0 %v69
    %136 = vmatpush.msra.mxu0 %v67
    %137 = vmatpush.msra.mxu0 %v65
    %138 = vmatpush.msra.mxu0 %v63
    %139 = vmatmul.f32.gmra.mxu0 %v60
    %v140 = vpop.f32.mrf.mxu0
    %v141 = vadd.f32 %v97, %v140
    %142 = vmatmul.f32.gmra.mxu0 %v61
    %v143 = vpop.f32.mrf.mxu0
    %v144 = vadd.f32 %v97, %v143
    %145 = vdwg.mxu0
    %146 = vst [vmem:[#allocation8] sm:$0xff] %v118
    %147 = vst [vmem:[#allocation8 + $0x8] sm:$0xff] %v141
    %148 = vst [vmem:[#allocation8 + $0x10] sm:$0xff] %v121
    %149 = vst [vmem:[#allocation8 + $0x18] sm:$0xff] %v144
    // Predicated region
    $region26: #{tpu_custom_call.1} parent=1 // pred_check
      _
    $region27: #{tpu_custom_call.1} parent=1 // pred_check_branch
      %151 = sbr.rel (0) target = $region29
    $region28: #{tpu_custom_call.1} parent=1 // pred_region
      %153 = vsyncadd [#allocation4], 0
      %s154 = sshll.u32 [#allocation8], 4
      %s155 = int_to_ptr.vmem [resolvable:$true] %s154
      %s156 = sshll.u32 %s3, 4
      %s157 = int_to_ptr.hbm [resolvable:$true] %s156
      %162 = dma.vmem_to_hbm [thread:$0]  %s155, 512, %s157, [#allocation4], 256, 256, 16
    $region29: #{tpu_custom_call.1} parent=1 // pred_fallthru
      _
    // Predicated region
    $region30: #{tpu_custom_call.1} parent=1 // pred_check
      _
    $region31: #{tpu_custom_call.1} parent=1 // pred_check_branch
      %164 = sbr.rel (0) target = $region33
    $region32: #{tpu_custom_call.1} parent=1 // pred_region
      %166 = dma.done [#allocation4], 512
    $region33: #{tpu_custom_call.1} parent=1 // pred_fallthru
      _
    %167 = vsyncpa [#allocation3], 1
    %168 = vsyncpa [#allocation6], 1
    %169 = vsyncpa [#allocation4], 1

</llo_original>
